<compile_context>
chip_gen: v5e
topology: v5e:2x2
jax: 0.10.0
libtpu: 0.0.40
codegen_flags: <defaults>
</compile_context>

<pallas_src>
import math
import functools

import jax
import jax.numpy as jnp
from jax.experimental import pallas as pl
from jax.experimental.pallas import tpu as pltpu


# ----------------------------------------------------------------------------
# Fused kernel: QKV proj + batched raw scores + context + interleaved o-proj.
# One grid step == one batch element.
# ----------------------------------------------------------------------------
def _fused_mha_kernel(q_ref, k_ref, v_ref,
                      wqkv_ref, bqkv_ref,
                      wo_ref, bo_ref,
                      scores_ref, out_ref,
                      ctx_scr,
                      *, num_heads, seq_len, embed_dim):
    H, S, E = num_heads, seq_len, embed_dim
    Dh = E // H
    scale = 1.0 / math.sqrt(float(E))        # torch divides by sqrt(EMBED_DIM)

    xq = q_ref[0]                            # (S, E)
    xk = k_ref[0]
    xv = v_ref[0]

    # ---- fused, lane-dense QKV projections: (S,E)@(E,E) on the MXU ----------
    q = jnp.dot(xq, wqkv_ref[0], preferred_element_type=jnp.float32) + bqkv_ref[0]
    k = jnp.dot(xk, wqkv_ref[1], preferred_element_type=jnp.float32) + bqkv_ref[1]
    v = jnp.dot(xv, wqkv_ref[2], preferred_element_type=jnp.float32) + bqkv_ref[2]

    # ---- head split: static lane slices stacked into (H, S, Dh) -------------
    def split_heads(x):
        return jnp.stack([x[:, h * Dh:(h + 1) * Dh] for h in range(H)], axis=0)

    q_h = split_heads(q)
    k_h = split_heads(k)
    v_h = split_heads(v)

    # ---- raw scaled scores (mask=None path: NO softmax), batched over heads -
    s_all = jnp.einsum('hqd,hkd->hqk', q_h, k_h,
                       preferred_element_type=jnp.float32) * scale
    scores_ref[0] = s_all                    # single (H, S, S) block store

    # ---- context, batched over heads; streamed straight into VMEM scratch ---
    ctx = jnp.einsum('hqk,hkd->hqd', s_all, v_h,
                     preferred_element_type=jnp.float32)       # (H, S, Dh)
    for h in range(H):                       # contiguous static stores
        ctx_scr[h * S:(h + 1) * S, :] = ctx[h]

    # ---- torch `.view(B, S, E)` interleave + fused output projection --------
    # Output row s consumes flat rows s*H + kk (kk = 0..H-1) of the (H*S, Dh)
    # context, so column block kk of the (S, E) view is a sublane-strided read.
    ctx_view = jnp.concatenate(
        [ctx_scr[pl.ds(kk, S, stride=H), :] for kk in range(H)], axis=1)  # (S,E)
    out = jnp.dot(ctx_view, wo_ref[...],
                  preferred_element_type=jnp.float32) + bo_ref[...]
    out_ref[0] = out.astype(out_ref.dtype)   # one lane-dense full-tile store


# ----------------------------------------------------------------------------
# Wrapper
# ----------------------------------------------------------------------------
def multihead_self_attn(Q, K, V, params, *, num_heads):
    """Returns (attention_scores, layer_output) matching the PyTorch module
    with return_attention=True and mask=None."""
    B, S, E = Q.shape
    assert E % num_heads == 0
    Dh = E // num_heads

    # torch.nn.Linear weights are (out, in); transpose once so kernel does x@W^T.
    wqkv = jnp.stack([params["wq"].T, params["wk"].T, params["wv"].T])   # (3,E,E)
    bqkv = jnp.stack([params["bq"], params["bk"], params["bv"]]).reshape(3, 1, E)
    woT = params["wo"].T                                                  # (E,E)
    bo2 = params["bo"].reshape(1, E)

    kern = functools.partial(_fused_mha_kernel,
                             num_heads=num_heads, seq_len=S, embed_dim=E)

    act_spec = pl.BlockSpec((1, S, E), lambda b: (b, 0, 0))

    flops = 2 * B * (4 * S * E * E + 2 * S * S * E)   # 3 proj + scores + ctx + o_proj
    bytes_accessed = 4 * (3 * B * S * E              # Q/K/V activations
                          + 4 * E * E + 4 * E        # weights + biases
                          + B * num_heads * S * S    # scores out
                          + B * S * E)               # layer output

    scores, out = pl.pallas_call(
        kern,
        out_shape=(
            jax.ShapeDtypeStruct((B, num_heads, S, S), jnp.float32),
            jax.ShapeDtypeStruct((B, S, E), jnp.float32),
        ),
        grid=(B,),
        in_specs=[act_spec, act_spec, act_spec,
                  pl.BlockSpec((3, E, E), lambda b: (0, 0, 0)),
                  pl.BlockSpec((3, 1, E), lambda b: (0, 0, 0)),
                  pl.BlockSpec((E, E), lambda b: (0, 0)),
                  pl.BlockSpec((1, E), lambda b: (0, 0))],
        out_specs=(
            pl.BlockSpec((1, num_heads, S, S), lambda b: (b, 0, 0, 0)),
            pl.BlockSpec((1, S, E), lambda b: (b, 0, 0)),
        ),
        scratch_shapes=[pltpu.VMEM((num_heads * S, Dh), jnp.float32)],
        compiler_params=pltpu.CompilerParams(
            dimension_semantics=("parallel",),      # batch -> both TCs on v7x
            vmem_limit_bytes=32 * 1024 * 1024,      # explicit scoped-VMEM budget
        ),
        cost_estimate=pl.CostEstimate(flops=flops, transcendentals=0,
                                      bytes_accessed=bytes_accessed),
    )(Q, K, V, wqkv, bqkv, woT, bo2)

    return scores, out


# ----------------------------------------------------------------------------
# Pure-JAX reference (mirrors the PyTorch forward exactly) for verification.
# ----------------------------------------------------------------------------
def _reference(Q, K, V, params, *, num_heads):
    B, S, E = Q.shape
    Dh = E // num_heads

    def lin(x, w, b):
        return x @ w.T + b

    q = lin(Q, params["wq"], params["bq"]).reshape(B, S, num_heads, Dh).transpose(0, 2, 1, 3)
    k = lin(K, params["wk"], params["bk"]).reshape(B, S, num_heads, Dh).transpose(0, 2, 1, 3)
    v = lin(V, params["wv"], params["bv"]).reshape(B, S, num_heads, Dh).transpose(0, 2, 1, 3)
    scores = jnp.einsum("bhqd,bhkd->bhqk", q, k) / math.sqrt(float(E))
    out = jnp.einsum("bhqk,bhkd->bhqd", scores, v)        # no softmax (mask=None)
    out = out.reshape(B, S, E)                            # torch .view, heads interleaved
    out = lin(out, params["wo"], params["bo"])
    return scores, out


if __name__ == "__main__":
    B, S, E, H = 2, 8, 32, 4

    key = jax.random.PRNGKey(0)
    keys = jax.random.split(key, 11)

    Q = jax.random.normal(keys[0], (B, S, E), dtype=jnp.float32)
    K = jax.random.normal(keys[1], (B, S, E), dtype=jnp.float32)
    V = jax.random.normal(keys[2], (B, S, E), dtype=jnp.float32)

    # Deterministic parameter init (torch.nn.Linear-style uniform bound).
    bound = 1.0 / math.sqrt(E)
    params = {
        "wq": jax.random.uniform(keys[3], (E, E), jnp.float32, -bound, bound),
        "bq": jax.random.uniform(keys[4], (E,),   jnp.float32, -bound, bound),
        "wk": jax.random.uniform(keys[5], (E, E), jnp.float32, -bound, bound),
        "bk": jax.random.uniform(keys[6], (E,),   jnp.float32, -bound, bound),
        "wv": jax.random.uniform(keys[7], (E, E), jnp.float32, -bound, bound),
        "bv": jax.random.uniform(keys[8], (E,),   jnp.float32, -bound, bound),
        "wo": jax.random.uniform(keys[9], (E, E), jnp.float32, -bound, bound),
        "bo": jax.random.uniform(keys[10], (E,),  jnp.float32, -bound, bound),
    }

    scores, out = multihead_self_attn(Q, K, V, params, num_heads=H)
    jax.block_until_ready((scores, out))

    ref_scores, ref_out = _reference(Q, K, V, params, num_heads=H)
    assert jnp.allclose(scores, ref_scores, atol=1e-3, rtol=1e-3)
    assert jnp.allclose(out, ref_out, atol=1e-3, rtol=1e-3)

    print("KERNEL_OK")
</pallas_src>

<mosaic_0001>
module attributes {stable_mosaic.version = 11 : i64} {
  func.func @_fused_mha_kernel(%arg0: i32, %arg1: memref<1x8x32xf32, #tpu.memory_space<vmem>>, %arg2: memref<1x8x32xf32, #tpu.memory_space<vmem>>, %arg3: memref<1x8x32xf32, #tpu.memory_space<vmem>>, %arg4: memref<3x32x32xf32, #tpu.memory_space<vmem>>, %arg5: memref<3x1x32xf32, #tpu.memory_space<vmem>>, %arg6: memref<32x32xf32, #tpu.memory_space<vmem>>, %arg7: memref<1x32xf32, #tpu.memory_space<vmem>>, %arg8: memref<1x4x8x8xf32, #tpu.memory_space<vmem>>, %arg9: memref<1x8x32xf32, #tpu.memory_space<vmem>>, %arg10: memref<32x8xf32, #tpu.memory_space<vmem>>) attributes {dimension_semantics = [#tpu.dimension_semantics<parallel>], iteration_bounds = array<i64: 2>, scalar_prefetch = 0 : i64, scratch_operands = 1 : i64, tpu.core_type = #tpu.core_type<tc>, window_params = [{transform_indices = @transform_0, window_bounds = array<i64: 1, 8, 32>}, {transform_indices = @transform_1, window_bounds = array<i64: 1, 8, 32>}, {transform_indices = @transform_2, window_bounds = array<i64: 1, 8, 32>}, {pipeline_mode = #tpu.pipeline_mode<synchronous>, transform_indices = @transform_3, window_bounds = array<i64: 3, 32, 32>}, {pipeline_mode = #tpu.pipeline_mode<synchronous>, transform_indices = @transform_4, window_bounds = array<i64: 3, 1, 32>}, {pipeline_mode = #tpu.pipeline_mode<synchronous>, transform_indices = @transform_5, window_bounds = array<i64: 32, 32>}, {pipeline_mode = #tpu.pipeline_mode<synchronous>, transform_indices = @transform_6, window_bounds = array<i64: 1, 32>}, {transform_indices = @transform_7, window_bounds = array<i64: 1, 4, 8, 8>}, {transform_indices = @transform_8, window_bounds = array<i64: 1, 8, 32>}]} {
    %c0 = arith.constant 0 : index
    %c0_0 = arith.constant 0 : index
    %c0_1 = arith.constant 0 : index
    %0 = vector.load %arg1[%c0, %c0_0, %c0_1] : memref<1x8x32xf32, #tpu.memory_space<vmem>>, vector<1x8x32xf32>
    %1 = vector.shape_cast %0 : vector<1x8x32xf32> to vector<8x32xf32>
    %c0_2 = arith.constant 0 : index
    %c0_3 = arith.constant 0 : index
    %c0_4 = arith.constant 0 : index
    %2 = vector.load %arg2[%c0_2, %c0_3, %c0_4] : memref<1x8x32xf32, #tpu.memory_space<vmem>>, vector<1x8x32xf32>
    %3 = vector.shape_cast %2 : vector<1x8x32xf32> to vector<8x32xf32>
    %c0_5 = arith.constant 0 : index
    %c0_6 = arith.constant 0 : index
    %c0_7 = arith.constant 0 : index
    %4 = vector.load %arg3[%c0_5, %c0_6, %c0_7] : memref<1x8x32xf32, #tpu.memory_space<vmem>>, vector<1x8x32xf32>
    %5 = vector.shape_cast %4 : vector<1x8x32xf32> to vector<8x32xf32>
    %c0_8 = arith.constant 0 : index
    %c0_9 = arith.constant 0 : index
    %c0_10 = arith.constant 0 : index
    %6 = vector.load %arg4[%c0_8, %c0_9, %c0_10] : memref<3x32x32xf32, #tpu.memory_space<vmem>>, vector<1x32x32xf32>
    %7 = vector.shape_cast %6 : vector<1x32x32xf32> to vector<32x32xf32>
    %cst = arith.constant dense<0.000000e+00> : vector<8x32xf32>
    %8 = tpu.matmul %1, %7, %cst {dimension_numbers = #tpu.dot_dimension_numbers<[1], [0], [0], [1], [0, 0, 1, 1], [], []>} : vector<8x32xf32>, vector<32x32xf32>, vector<8x32xf32> -> vector<8x32xf32>
    %c0_11 = arith.constant 0 : index
    %c0_12 = arith.constant 0 : index
    %c0_13 = arith.constant 0 : index
    %9 = vector.load %arg5[%c0_11, %c0_12, %c0_13] : memref<3x1x32xf32, #tpu.memory_space<vmem>>, vector<1x1x32xf32>
    %10 = vector.shape_cast %9 : vector<1x1x32xf32> to vector<1x32xf32>
    %11 = vector.broadcast %10 : vector<1x32xf32> to vector<8x32xf32>
    %12 = arith.addf %8, %11 : vector<8x32xf32>
    %c1 = arith.constant 1 : index
    %c0_14 = arith.constant 0 : index
    %c0_15 = arith.constant 0 : index
    %13 = vector.load %arg4[%c1, %c0_14, %c0_15] : memref<3x32x32xf32, #tpu.memory_space<vmem>>, vector<1x32x32xf32>
    %14 = vector.shape_cast %13 : vector<1x32x32xf32> to vector<32x32xf32>
    %cst_16 = arith.constant dense<0.000000e+00> : vector<8x32xf32>
    %15 = tpu.matmul %3, %14, %cst_16 {dimension_numbers = #tpu.dot_dimension_numbers<[1], [0], [0], [1], [0, 0, 1, 1], [], []>} : vector<8x32xf32>, vector<32x32xf32>, vector<8x32xf32> -> vector<8x32xf32>
    %c1_17 = arith.constant 1 : index
    %c0_18 = arith.constant 0 : index
    %c0_19 = arith.constant 0 : index
    %16 = vector.load %arg5[%c1_17, %c0_18, %c0_19] : memref<3x1x32xf32, #tpu.memory_space<vmem>>, vector<1x1x32xf32>
    %17 = vector.shape_cast %16 : vector<1x1x32xf32> to vector<1x32xf32>
    %18 = vector.broadcast %17 : vector<1x32xf32> to vector<8x32xf32>
    %19 = arith.addf %15, %18 : vector<8x32xf32>
    %c2 = arith.constant 2 : index
    %c0_20 = arith.constant 0 : index
    %c0_21 = arith.constant 0 : index
    %20 = vector.load %arg4[%c2, %c0_20, %c0_21] : memref<3x32x32xf32, #tpu.memory_space<vmem>>, vector<1x32x32xf32>
    %21 = vector.shape_cast %20 : vector<1x32x32xf32> to vector<32x32xf32>
    %cst_22 = arith.constant dense<0.000000e+00> : vector<8x32xf32>
    %22 = tpu.matmul %5, %21, %cst_22 {dimension_numbers = #tpu.dot_dimension_numbers<[1], [0], [0], [1], [0, 0, 1, 1], [], []>} : vector<8x32xf32>, vector<32x32xf32>, vector<8x32xf32> -> vector<8x32xf32>
    %c2_23 = arith.constant 2 : index
    %c0_24 = arith.constant 0 : index
    %c0_25 = arith.constant 0 : index
    %23 = vector.load %arg5[%c2_23, %c0_24, %c0_25] : memref<3x1x32xf32, #tpu.memory_space<vmem>>, vector<1x1x32xf32>
    %24 = vector.shape_cast %23 : vector<1x1x32xf32> to vector<1x32xf32>
    %25 = vector.broadcast %24 : vector<1x32xf32> to vector<8x32xf32>
    %26 = arith.addf %22, %25 : vector<8x32xf32>
    %27 = vector.extract_strided_slice %12 {offsets = [0, 0], sizes = [8, 8], strides = [1, 1]} : vector<8x32xf32> to vector<8x8xf32>
    %28 = vector.extract_strided_slice %12 {offsets = [0, 8], sizes = [8, 8], strides = [1, 1]} : vector<8x32xf32> to vector<8x8xf32>
    %29 = vector.extract_strided_slice %12 {offsets = [0, 16], sizes = [8, 8], strides = [1, 1]} : vector<8x32xf32> to vector<8x8xf32>
    %30 = vector.extract_strided_slice %12 {offsets = [0, 24], sizes = [8, 8], strides = [1, 1]} : vector<8x32xf32> to vector<8x8xf32>
    %31 = vector.shape_cast %27 : vector<8x8xf32> to vector<1x8x8xf32>
    %32 = vector.shape_cast %28 : vector<8x8xf32> to vector<1x8x8xf32>
    %33 = vector.shape_cast %29 : vector<8x8xf32> to vector<1x8x8xf32>
    %34 = vector.shape_cast %30 : vector<8x8xf32> to vector<1x8x8xf32>
    %35 = tpu.concatenate %31, %32, %33, %34 in 0 : vector<1x8x8xf32>, vector<1x8x8xf32>, vector<1x8x8xf32>, vector<1x8x8xf32> -> vector<4x8x8xf32>
    %36 = vector.extract_strided_slice %19 {offsets = [0, 0], sizes = [8, 8], strides = [1, 1]} : vector<8x32xf32> to vector<8x8xf32>
    %37 = vector.extract_strided_slice %19 {offsets = [0, 8], sizes = [8, 8], strides = [1, 1]} : vector<8x32xf32> to vector<8x8xf32>
    %38 = vector.extract_strided_slice %19 {offsets = [0, 16], sizes = [8, 8], strides = [1, 1]} : vector<8x32xf32> to vector<8x8xf32>
    %39 = vector.extract_strided_slice %19 {offsets = [0, 24], sizes = [8, 8], strides = [1, 1]} : vector<8x32xf32> to vector<8x8xf32>
    %40 = vector.shape_cast %36 : vector<8x8xf32> to vector<1x8x8xf32>
    %41 = vector.shape_cast %37 : vector<8x8xf32> to vector<1x8x8xf32>
    %42 = vector.shape_cast %38 : vector<8x8xf32> to vector<1x8x8xf32>
    %43 = vector.shape_cast %39 : vector<8x8xf32> to vector<1x8x8xf32>
    %44 = tpu.concatenate %40, %41, %42, %43 in 0 : vector<1x8x8xf32>, vector<1x8x8xf32>, vector<1x8x8xf32>, vector<1x8x8xf32> -> vector<4x8x8xf32>
    %45 = vector.extract_strided_slice %26 {offsets = [0, 0], sizes = [8, 8], strides = [1, 1]} : vector<8x32xf32> to vector<8x8xf32>
    %46 = vector.extract_strided_slice %26 {offsets = [0, 8], sizes = [8, 8], strides = [1, 1]} : vector<8x32xf32> to vector<8x8xf32>
    %47 = vector.extract_strided_slice %26 {offsets = [0, 16], sizes = [8, 8], strides = [1, 1]} : vector<8x32xf32> to vector<8x8xf32>
    %48 = vector.extract_strided_slice %26 {offsets = [0, 24], sizes = [8, 8], strides = [1, 1]} : vector<8x32xf32> to vector<8x8xf32>
    %49 = vector.shape_cast %45 : vector<8x8xf32> to vector<1x8x8xf32>
    %50 = vector.shape_cast %46 : vector<8x8xf32> to vector<1x8x8xf32>
    %51 = vector.shape_cast %47 : vector<8x8xf32> to vector<1x8x8xf32>
    %52 = vector.shape_cast %48 : vector<8x8xf32> to vector<1x8x8xf32>
    %53 = tpu.concatenate %49, %50, %51, %52 in 0 : vector<1x8x8xf32>, vector<1x8x8xf32>, vector<1x8x8xf32>, vector<1x8x8xf32> -> vector<4x8x8xf32>
    "tpu.trace_start"() <{level = 10 : i32, message = "hqd,hkd->hqk"}> : () -> ()
    %cst_26 = arith.constant dense<0.000000e+00> : vector<4x8x8xf32>
    %54 = tpu.matmul %35, %44, %cst_26 {dimension_numbers = #tpu.dot_dimension_numbers<[2], [2], [1], [1], [0, 0, 0, 1, 1, 1], [0], [0]>} : vector<4x8x8xf32>, vector<4x8x8xf32>, vector<4x8x8xf32> -> vector<4x8x8xf32>
    "tpu.trace_stop"() : () -> ()
    %cst_27 = arith.constant 0.176776692 : f32
    %55 = vector.broadcast %cst_27 : f32 to vector<4x8x8xf32>
    %56 = arith.mulf %54, %55 : vector<4x8x8xf32>
    %c0_28 = arith.constant 0 : index
    %c0_29 = arith.constant 0 : index
    %c0_30 = arith.constant 0 : index
    %c0_31 = arith.constant 0 : index
    %57 = vector.load %arg8[%c0_28, %c0_29, %c0_30, %c0_31] : memref<1x4x8x8xf32, #tpu.memory_space<vmem>>, vector<1x4x8x8xf32>
    %58 = vector.shape_cast %57 : vector<1x4x8x8xf32> to vector<4x8x8xf32>
    %59 = vector.shape_cast %56 : vector<4x8x8xf32> to vector<1x4x8x8xf32>
    tpu.vector_store %arg8[%c0_28, %c0_29, %c0_30, %c0_31], %59 {strides = array<i32>} : memref<1x4x8x8xf32, #tpu.memory_space<vmem>>, vector<1x4x8x8xf32>,
    "tpu.trace_start"() <{level = 10 : i32, message = "hqk,hkd->hqd"}> : () -> ()
    %cst_32 = arith.constant dense<0.000000e+00> : vector<4x8x8xf32>
    %60 = tpu.matmul %56, %53, %cst_32 {dimension_numbers = #tpu.dot_dimension_numbers<[2], [1], [1], [2], [0, 0, 0, 1, 1, 2], [0], [0]>} : vector<4x8x8xf32>, vector<4x8x8xf32>, vector<4x8x8xf32> -> vector<4x8x8xf32>
    "tpu.trace_stop"() : () -> ()
    %61 = vector.extract_strided_slice %60 {offsets = [0, 0, 0], sizes = [1, 8, 8], strides = [1, 1, 1]} : vector<4x8x8xf32> to vector<1x8x8xf32>
    %62 = vector.shape_cast %61 : vector<1x8x8xf32> to vector<8x8xf32>
    %c0_33 = arith.constant 0 : index
    %c0_34 = arith.constant 0 : index
    %63 = vector.load %arg10[%c0_33, %c0_34] : memref<32x8xf32, #tpu.memory_space<vmem>>, vector<8x8xf32>
    tpu.vector_store %arg10[%c0_33, %c0_34], %62 {strides = array<i32>} : memref<32x8xf32, #tpu.memory_space<vmem>>, vector<8x8xf32>,
    %64 = vector.extract_strided_slice %60 {offsets = [1, 0, 0], sizes = [1, 8, 8], strides = [1, 1, 1]} : vector<4x8x8xf32> to vector<1x8x8xf32>
    %65 = vector.shape_cast %64 : vector<1x8x8xf32> to vector<8x8xf32>
    %c8 = arith.constant 8 : index
    %c0_35 = arith.constant 0 : index
    %66 = vector.load %arg10[%c8, %c0_35] : memref<32x8xf32, #tpu.memory_space<vmem>>, vector<8x8xf32>
    tpu.vector_store %arg10[%c8, %c0_35], %65 {strides = array<i32>} : memref<32x8xf32, #tpu.memory_space<vmem>>, vector<8x8xf32>,
    %67 = vector.extract_strided_slice %60 {offsets = [2, 0, 0], sizes = [1, 8, 8], strides = [1, 1, 1]} : vector<4x8x8xf32> to vector<1x8x8xf32>
    %68 = vector.shape_cast %67 : vector<1x8x8xf32> to vector<8x8xf32>
    %c16 = arith.constant 16 : index
    %c0_36 = arith.constant 0 : index
    %69 = vector.load %arg10[%c16, %c0_36] : memref<32x8xf32, #tpu.memory_space<vmem>>, vector<8x8xf32>
    tpu.vector_store %arg10[%c16, %c0_36], %68 {strides = array<i32>} : memref<32x8xf32, #tpu.memory_space<vmem>>, vector<8x8xf32>,
    %70 = vector.extract_strided_slice %60 {offsets = [3, 0, 0], sizes = [1, 8, 8], strides = [1, 1, 1]} : vector<4x8x8xf32> to vector<1x8x8xf32>
    %71 = vector.shape_cast %70 : vector<1x8x8xf32> to vector<8x8xf32>
    %c24 = arith.constant 24 : index
    %c0_37 = arith.constant 0 : index
    %72 = vector.load %arg10[%c24, %c0_37] : memref<32x8xf32, #tpu.memory_space<vmem>>, vector<8x8xf32>
    tpu.vector_store %arg10[%c24, %c0_37], %71 {strides = array<i32>} : memref<32x8xf32, #tpu.memory_space<vmem>>, vector<8x8xf32>,
    %c0_38 = arith.constant 0 : index
    %c0_39 = arith.constant 0 : index
    %73 = tpu.strided_load %arg10[%c0_38, %c0_39] {strides = array<i32: 4, 1>} : memref<32x8xf32, #tpu.memory_space<vmem>>, vector<8x8xf32>
    %c1_40 = arith.constant 1 : index
    %c0_41 = arith.constant 0 : index
    %74 = tpu.strided_load %arg10[%c1_40, %c0_41] {strides = array<i32: 4, 1>} : memref<32x8xf32, #tpu.memory_space<vmem>>, vector<8x8xf32>
    %c2_42 = arith.constant 2 : index
    %c0_43 = arith.constant 0 : index
    %75 = tpu.strided_load %arg10[%c2_42, %c0_43] {strides = array<i32: 4, 1>} : memref<32x8xf32, #tpu.memory_space<vmem>>, vector<8x8xf32>
    %c3 = arith.constant 3 : index
    %c0_44 = arith.constant 0 : index
    %76 = tpu.strided_load %arg10[%c3, %c0_44] {strides = array<i32: 4, 1>} : memref<32x8xf32, #tpu.memory_space<vmem>>, vector<8x8xf32>
    %77 = tpu.concatenate %73, %74, %75, %76 in 1 : vector<8x8xf32>, vector<8x8xf32>, vector<8x8xf32>, vector<8x8xf32> -> vector<8x32xf32>
    %c0_45 = arith.constant 0 : index
    %c0_46 = arith.constant 0 : index
    %78 = vector.load %arg6[%c0_45, %c0_46] : memref<32x32xf32, #tpu.memory_space<vmem>>, vector<32x32xf32>
    %cst_47 = arith.constant dense<0.000000e+00> : vector<8x32xf32>
    %79 = tpu.matmul %77, %78, %cst_47 {dimension_numbers = #tpu.dot_dimension_numbers<[1], [0], [0], [1], [0, 0, 1, 1], [], []>} : vector<8x32xf32>, vector<32x32xf32>, vector<8x32xf32> -> vector<8x32xf32>
    %c0_48 = arith.constant 0 : index
    %c0_49 = arith.constant 0 : index
    %80 = vector.load %arg7[%c0_48, %c0_49] : memref<1x32xf32, #tpu.memory_space<vmem>>, vector<1x32xf32>
    %81 = vector.broadcast %80 : vector<1x32xf32> to vector<8x32xf32>
    %82 = arith.addf %79, %81 : vector<8x32xf32>
    %c0_50 = arith.constant 0 : index
    %c0_51 = arith.constant 0 : index
    %c0_52 = arith.constant 0 : index
    %83 = vector.load %arg9[%c0_50, %c0_51, %c0_52] : memref<1x8x32xf32, #tpu.memory_space<vmem>>, vector<1x8x32xf32>
    %84 = vector.shape_cast %83 : vector<1x8x32xf32> to vector<8x32xf32>
    %85 = vector.shape_cast %82 : vector<8x32xf32> to vector<1x8x32xf32>
    tpu.vector_store %arg9[%c0_50, %c0_51, %c0_52], %85 {strides = array<i32>} : memref<1x8x32xf32, #tpu.memory_space<vmem>>, vector<1x8x32xf32>,
    return
  }
  func.func @transform_0(%arg0: i32) -> (i32, i32, i32) {
    %c0_i32 = arith.constant 0 : i32
    %c0_i32_0 = arith.constant 0 : i32
    %c0_i32_1 = arith.constant 0 : i32
    return %arg0, %c0_i32, %c0_i32_0 : i32, i32, i32
  }
  func.func @transform_1(%arg0: i32) -> (i32, i32, i32) {
    %c0_i32 = arith.constant 0 : i32
    %c0_i32_0 = arith.constant 0 : i32
    %c0_i32_1 = arith.constant 0 : i32
    return %arg0, %c0_i32, %c0_i32_0 : i32, i32, i32
  }
  func.func @transform_2(%arg0: i32) -> (i32, i32, i32) {
    %c0_i32 = arith.constant 0 : i32
    %c0_i32_0 = arith.constant 0 : i32
    %c0_i32_1 = arith.constant 0 : i32
    return %arg0, %c0_i32, %c0_i32_0 : i32, i32, i32
  }
  func.func @transform_3(%arg0: i32) -> (i32, i32, i32) {
    %c0_i32 = arith.constant 0 : i32
    %c0_i32_0 = arith.constant 0 : i32
    %c0_i32_1 = arith.constant 0 : i32
    %c0_i32_2 = arith.constant 0 : i32
    return %c0_i32, %c0_i32_0, %c0_i32_1 : i32, i32, i32
  }
  func.func @transform_4(%arg0: i32) -> (i32, i32, i32) {
    %c0_i32 = arith.constant 0 : i32
    %c0_i32_0 = arith.constant 0 : i32
    %c0_i32_1 = arith.constant 0 : i32
    %c0_i32_2 = arith.constant 0 : i32
    return %c0_i32, %c0_i32_0, %c0_i32_1 : i32, i32, i32
  }
  func.func @transform_5(%arg0: i32) -> (i32, i32) {
    %c0_i32 = arith.constant 0 : i32
    %c0_i32_0 = arith.constant 0 : i32
    %c0_i32_1 = arith.constant 0 : i32
    return %c0_i32, %c0_i32_0 : i32, i32
  }
  func.func @transform_6(%arg0: i32) -> (i32, i32) {
    %c0_i32 = arith.constant 0 : i32
    %c0_i32_0 = arith.constant 0 : i32
    %c0_i32_1 = arith.constant 0 : i32
    return %c0_i32, %c0_i32_0 : i32, i32
  }
  func.func @transform_7(%arg0: i32) -> (i32, i32, i32, i32) {
    %c0_i32 = arith.constant 0 : i32
    %c0_i32_0 = arith.constant 0 : i32
    %c0_i32_1 = arith.constant 0 : i32
    %c0_i32_2 = arith.constant 0 : i32
    return %arg0, %c0_i32, %c0_i32_0, %c0_i32_1 : i32, i32, i32, i32
  }
  func.func @transform_8(%arg0: i32) -> (i32, i32, i32) {
    %c0_i32 = arith.constant 0 : i32
    %c0_i32_0 = arith.constant 0 : i32
    %c0_i32_1 = arith.constant 0 : i32
    return %arg0, %c0_i32, %c0_i32_0 : i32, i32, i32
  }
}

</mosaic_0001>

<llo_original>
// kernel: tpu_custom_call.1
$region0: #{tpu_custom_call.1}
  #allocation0 [shape = 'u32[]', space=smem, size = 0x4, offset = 0x4, fixed_abs, tag = 'smem constant byte address 0x4 - core index']
  #allocation1 [shape = 'u32[72,128]{1,0:T(1,128)}', space=vmem, size = 0x9000, scoped, tag = 'internal scratch']
  #allocation2 [shape = 'f32[32,8]{1,0:T(8,128)}', space=vmem, size = 0x4000, scoped, tag = 'scratch operand']
  %s0 = inlined_call_operand.hbm [shape: f32[2,8,32], index: 0, kind: input, shape index: {}]
  %s1 = inlined_call_operand.hbm [shape: f32[2,8,32], index: 1, kind: input, shape index: {}]
  %s2 = inlined_call_operand.hbm [shape: f32[2,8,32], index: 2, kind: input, shape index: {}]
  %s3 = inlined_call_operand.hbm [shape: f32[3,32,32], index: 3, kind: input, shape index: {}]
  %s4 = inlined_call_operand.vmem [shape: f32[3,1,32], index: 4, kind: input, shape index: {}]
  %s5 = inlined_call_operand.hbm [shape: f32[32,32], index: 5, kind: input, shape index: {}]
  %s6 = inlined_call_operand.vmem [shape: f32[1,32], index: 6, kind: input, shape index: {}]
  %s7 = inlined_call_operand.hbm [shape: f32[2,4,8,8], index: 7, kind: output, shape index: {0}]
  %s8 = inlined_call_operand.hbm [shape: f32[2,8,32], index: 8, kind: output, shape index: {1}]
  %9 = xla_tuple %s7, %s8
  %s10 = sld [smem:[#allocation0]]
  $region89: #{tpu_custom_call.1} parent=0
    _
  %s12 = ssub.s32 1, %s10
  %s13 = scalar_select 0, %s12, %s10
  $region1: #{tpu_custom_call.1} parent=0
    #allocation3 [shape = 'u8[8192]{0}', space=vmem, size = 0x2000, scoped, tag = 'input window, operand 0']
    #allocation4 [shape = 's32[2]{0}', space=sflag, size = 0x8, scoped, tag = 'scoped memory for tpu_custom_call.1']
    #allocation5 [shape = 's32[2]{0}', space=sflag, size = 0x8, scoped, tag = 'scoped memory for tpu_custom_call.1']
    #allocation6 [shape = 'u8[8192]{0}', space=vmem, size = 0x2000, scoped, tag = 'input window, operand 1']
    #allocation7 [shape = 's32[2]{0}', space=sflag, size = 0x8, scoped, tag = 'scoped memory for tpu_custom_call.1']
    #allocation8 [shape = 'u8[8192]{0}', space=vmem, size = 0x2000, scoped, tag = 'input window, operand 2']
    #allocation9 [shape = 'u8[49152]{0}', space=vmem, size = 0xc000, scoped, tag = 'input window, operand 3, single buffered']
    #allocation10 [shape = 's32[1]{0}', space=sflag, size = 0x4, scoped, tag = 'scoped memory for tpu_custom_call.1']
    #allocation11 [shape = 'u8[16384]{0}', space=vmem, size = 0x4000, scoped, tag = 'input window, operand 5, single buffered']
    #allocation12 [shape = 'u8[32768]{0}', space=vmem, size = 0x8000, scoped, tag = 'output window, operand 0']
    #allocation13 [shape = 'u8[8192]{0}', space=vmem, size = 0x2000, scoped, tag = 'output window, operand 1']
    #allocation14 [shape = 's32[2]{0}', space=sflag, size = 0x8, scoped, tag = 'scoped memory for tpu_custom_call.1']
    %14 = vsyncpa [#allocation4], 0
    %s15 = scalar_lea.sflag [#allocation4], 1
    %16 = vsyncpa %s15, 0
    %17 = vsyncpa [#allocation7], 0
    %s18 = scalar_lea.sflag [#allocation7], 1
    %19 = vsyncpa %s18, 0
    %20 = vsyncpa [#allocation10], 0
    %21 = vsyncpa [#allocation5], 0
    %s22 = scalar_lea.sflag [#allocation5], 1
    %23 = vsyncpa %s22, 0
    %24 = vsyncpa [#allocation14], 0
    %s25 = scalar_lea.sflag [#allocation14], 1
    %26 = vsyncpa %s25, 0
    loop: start=0, step=1, limit=4
    $region2: #{tpu_custom_call.1} parent=1 // loop_pre_header
      _
    $region3: #{tpu_custom_call.1} parent=1 // loop_header
      %s28 = sphi 0, %s32
      %p29 = scmp.ge.s32.totalorder %s28, 4
      %s38 = sphi 0, %s40
      %s41 = sphi 0, %s38
      %s42 = sphi 0, %s41
      %s58 = sphi 0, %s42
      %s64 = sphi 0, %s66
      %s67 = sphi 0, %s64
      %s68 = sphi 0, %s67
      %s84 = sphi 0, %s68
      %s90 = sphi 0, %s92
      %s93 = sphi 0, %s90
      %s94 = sphi 0, %s93
      %s110 = sphi 0, %s94
      %s114 = sphi 0, %s114
      %s116 = sphi 0, %s114
      %s117 = sphi 0, %s116
      %s131 = sphi 0, %s117
      %s135 = sphi 0, %s135
      %s137 = sphi 0, %s135
      %s138 = sphi 0, %s137
      %s152 = sphi 0, %s138
      %s156 = sphi 0, %s156
      %s158 = sphi 0, %s156
      %s159 = sphi 0, %s158
      %s173 = sphi 0, %s159
      %s177 = sphi 0, %s177
      %s179 = sphi 0, %s177
      %s180 = sphi 0, %s179
      %s194 = sphi 0, %s180
      %s200 = sphi 0, %s202
      %s203 = sphi 0, %s200
      %s204 = sphi 0, %s203
      %s220 = sphi 0, %s204
      %s226 = sphi 0, %s228
      %s229 = sphi 0, %s226
      %s230 = sphi 0, %s229
      %s246 = sphi 0, %s230
    $region4: #{tpu_custom_call.1} parent=1 // loop_header_branch
      %31 = sbr.rel (%p29) target = $region8
    $region5: #{tpu_custom_call.1} parent=1 // loop_body
      %s33 = ssub.s32 %s28, 1
      %s34 = ssub.s32 %s28, 2
      %s35 = sadd.s32 %s28, 1
      %s36 = ssub.s32 %s28, %s35
      %p37 = scmp.eq.s32.totalorder %s36, 0
      %s39 = sadd.s32 %s38, 1
      %s40 = scalar_select %p37, %s38, %s39
      %p43 = pneg %p37
      %p44 = scmp.eq.s32.totalorder %s28, 1
      %p45 = por %p43, %p44
      %p46 = scmp.ne.s32.totalorder %s38, %s41
      %p47 = scmp.eq.s32.totalorder %s28, 0
      %p48 = por %p46, %p47
      %p49 = scmp.ne.s32.totalorder %s38, %s41
      %p50 = scmp.eq.s32.totalorder %s33, 1
      %p51 = por %p49, %p50
      %p52 = scmp.ne.s32.totalorder %s41, %s42
      %p53 = scmp.eq.s32.totalorder %s33, 0
      %p54 = por %p52, %p53
      %p55 = scmp.ne.s32.totalorder %s41, %s42
      %p56 = scmp.eq.s32.totalorder %s34, 1
      %p57 = por %p55, %p56
      %p59 = scmp.ne.s32.totalorder %s42, %s58
      %p60 = scmp.eq.s32.totalorder %s34, 0
      %p61 = por %p59, %p60
      %s62 = ssub.s32 %s28, %s35
      %p63 = scmp.eq.s32.totalorder %s62, 0
      %s65 = sadd.s32 %s64, 1
      %s66 = scalar_select %p63, %s64, %s65
      %p69 = pneg %p63
      %p70 = scmp.eq.s32.totalorder %s28, 1
      %p71 = por %p69, %p70
      %p72 = scmp.ne.s32.totalorder %s64, %s67
      %p73 = scmp.eq.s32.totalorder %s28, 0
      %p74 = por %p72, %p73
      %p75 = scmp.ne.s32.totalorder %s64, %s67
      %p76 = scmp.eq.s32.totalorder %s33, 1
      %p77 = por %p75, %p76
      %p78 = scmp.ne.s32.totalorder %s67, %s68
      %p79 = scmp.eq.s32.totalorder %s33, 0
      %p80 = por %p78, %p79
      %p81 = scmp.ne.s32.totalorder %s67, %s68
      %p82 = scmp.eq.s32.totalorder %s34, 1
      %p83 = por %p81, %p82
      %p85 = scmp.ne.s32.totalorder %s68, %s84
      %p86 = scmp.eq.s32.totalorder %s34, 0
      %p87 = por %p85, %p86
      %s88 = ssub.s32 %s28, %s35
      %p89 = scmp.eq.s32.totalorder %s88, 0
      %s91 = sadd.s32 %s90, 1
      %s92 = scalar_select %p89, %s90, %s91
      %p95 = pneg %p89
      %p96 = scmp.eq.s32.totalorder %s28, 1
      %p97 = por %p95, %p96
      %p98 = scmp.ne.s32.totalorder %s90, %s93
      %p99 = scmp.eq.s32.totalorder %s28, 0
      %p100 = por %p98, %p99
      %p101 = scmp.ne.s32.totalorder %s90, %s93
      %p102 = scmp.eq.s32.totalorder %s33, 1
      %p103 = por %p101, %p102
      %p104 = scmp.ne.s32.totalorder %s93, %s94
      %p105 = scmp.eq.s32.totalorder %s33, 0
      %p106 = por %p104, %p105
      %p107 = scmp.ne.s32.totalorder %s93, %s94
      %p108 = scmp.eq.s32.totalorder %s34, 1
      %p109 = por %p107, %p108
      %p111 = scmp.ne.s32.totalorder %s94, %s110
      %p112 = scmp.eq.s32.totalorder %s34, 0
      %p113 = por %p111, %p112
      %s115 = sadd.s32 %s114, 1
      %p118 = scmp.eq.s32.totalorder %s28, 1
      %p119 = scmp.ne.s32.totalorder %s114, %s116
      %p120 = scmp.eq.s32.totalorder %s28, 0
      %p121 = por %p119, %p120
      %p122 = scmp.ne.s32.totalorder %s114, %s116
      %p123 = scmp.eq.s32.totalorder %s33, 1
      %p124 = por %p122, %p123
      %p125 = scmp.ne.s32.totalorder %s116, %s117
      %p126 = scmp.eq.s32.totalorder %s33, 0
      %p127 = por %p125, %p126
      %p128 = scmp.ne.s32.totalorder %s116, %s117
      %p129 = scmp.eq.s32.totalorder %s34, 1
      %p130 = por %p128, %p129
      %p132 = scmp.ne.s32.totalorder %s117, %s131
      %p133 = scmp.eq.s32.totalorder %s34, 0
      %p134 = por %p132, %p133
      %s136 = sadd.s32 %s135, 1
      %p139 = scmp.eq.s32.totalorder %s28, 1
      %p140 = scmp.ne.s32.totalorder %s135, %s137
      %p141 = scmp.eq.s32.totalorder %s28, 0
      %p142 = por %p140, %p141
      %p143 = scmp.ne.s32.totalorder %s135, %s137
      %p144 = scmp.eq.s32.totalorder %s33, 1
      %p145 = por %p143, %p144
      %p146 = scmp.ne.s32.totalorder %s137, %s138
      %p147 = scmp.eq.s32.totalorder %s33, 0
      %p148 = por %p146, %p147
      %p149 = scmp.ne.s32.totalorder %s137, %s138
      %p150 = scmp.eq.s32.totalorder %s34, 1
      %p151 = por %p149, %p150
      %p153 = scmp.ne.s32.totalorder %s138, %s152
      %p154 = scmp.eq.s32.totalorder %s34, 0
      %p155 = por %p153, %p154
      %s157 = sadd.s32 %s156, 1
      %p160 = scmp.eq.s32.totalorder %s28, 1
      %p161 = scmp.ne.s32.totalorder %s156, %s158
      %p162 = scmp.eq.s32.totalorder %s28, 0
      %p163 = por %p161, %p162
      %p164 = scmp.ne.s32.totalorder %s156, %s158
      %p165 = scmp.eq.s32.totalorder %s33, 1
      %p166 = por %p164, %p165
      %p167 = scmp.ne.s32.totalorder %s158, %s159
      %p168 = scmp.eq.s32.totalorder %s33, 0
      %p169 = por %p167, %p168
      %p170 = scmp.ne.s32.totalorder %s158, %s159
      %p171 = scmp.eq.s32.totalorder %s34, 1
      %p172 = por %p170, %p171
      %p174 = scmp.ne.s32.totalorder %s159, %s173
      %p175 = scmp.eq.s32.totalorder %s34, 0
      %p176 = por %p174, %p175
      %s178 = sadd.s32 %s177, 1
      %p181 = scmp.eq.s32.totalorder %s28, 1
      %p182 = scmp.ne.s32.totalorder %s177, %s179
      %p183 = scmp.eq.s32.totalorder %s28, 0
      %p184 = por %p182, %p183
      %p185 = scmp.ne.s32.totalorder %s177, %s179
      %p186 = scmp.eq.s32.totalorder %s33, 1
      %p187 = por %p185, %p186
      %p188 = scmp.ne.s32.totalorder %s179, %s180
      %p189 = scmp.eq.s32.totalorder %s33, 0
      %p190 = por %p188, %p189
      %p191 = scmp.ne.s32.totalorder %s179, %s180
      %p192 = scmp.eq.s32.totalorder %s34, 1
      %p193 = por %p191, %p192
      %p195 = scmp.ne.s32.totalorder %s180, %s194
      %p196 = scmp.eq.s32.totalorder %s34, 0
      %p197 = por %p195, %p196
      %s198 = ssub.s32 %s28, %s35
      %p199 = scmp.eq.s32.totalorder %s198, 0
      %s201 = sadd.s32 %s200, 1
      %s202 = scalar_select %p199, %s200, %s201
      %p205 = pneg %p199
      %p206 = scmp.eq.s32.totalorder %s28, 1
      %p207 = por %p205, %p206
      %p208 = scmp.ne.s32.totalorder %s200, %s203
      %p209 = scmp.eq.s32.totalorder %s28, 0
      %p210 = por %p208, %p209
      %p211 = scmp.ne.s32.totalorder %s200, %s203
      %p212 = scmp.eq.s32.totalorder %s33, 1
      %p213 = por %p211, %p212
      %p214 = scmp.ne.s32.totalorder %s203, %s204
      %p215 = scmp.eq.s32.totalorder %s33, 0
      %p216 = por %p214, %p215
      %p217 = scmp.ne.s32.totalorder %s203, %s204
      %p218 = scmp.eq.s32.totalorder %s34, 1
      %p219 = por %p217, %p218
      %p221 = scmp.ne.s32.totalorder %s204, %s220
      %p222 = scmp.eq.s32.totalorder %s34, 0
      %p223 = por %p221, %p222
      %s224 = ssub.s32 %s28, %s35
      %p225 = scmp.eq.s32.totalorder %s224, 0
      %s227 = sadd.s32 %s226, 1
      %s228 = scalar_select %p225, %s226, %s227
      %p231 = pneg %p225
      %p232 = scmp.eq.s32.totalorder %s28, 1
      %p233 = por %p231, %p232
      %p234 = scmp.ne.s32.totalorder %s226, %s229
      %p235 = scmp.eq.s32.totalorder %s28, 0
      %p236 = por %p234, %p235
      %p237 = scmp.ne.s32.totalorder %s226, %s229
      %p238 = scmp.eq.s32.totalorder %s33, 1
      %p239 = por %p237, %p238
      %p240 = scmp.ne.s32.totalorder %s229, %s230
      %p241 = scmp.eq.s32.totalorder %s33, 0
      %p242 = por %p240, %p241
      %p243 = scmp.ne.s32.totalorder %s229, %s230
      %p244 = scmp.eq.s32.totalorder %s34, 1
      %p245 = por %p243, %p244
      %p247 = scmp.ne.s32.totalorder %s230, %s246
      %p248 = scmp.eq.s32.totalorder %s34, 0
      %p249 = por %p247, %p248
      %p250 = scmp.le.s32.totalorder 1, %s28
      %p251 = scmp.lt.s32.totalorder %s28, 3
      %p252 = pnand %p250, %p251
      %p253 = pneg %p252
      // Predicated region
      $region9: #{tpu_custom_call.1} parent=5 // pred_check
        _
      $region10: #{tpu_custom_call.1} parent=5 // pred_check_branch
        %255 = sbr.rel (%p252) target = $region12
      $region11: #{tpu_custom_call.1} parent=5 // pred_region
        %s256 = ssub.s32 %s28, 1
        // Predicated region
        $region13: #{tpu_custom_call.1} parent=11 // pred_check
          %p257 = pneg %p127
        $region14: #{tpu_custom_call.1} parent=11 // pred_check_branch
          %259 = sbr.rel (%p257) target = $region16
        $region15: #{tpu_custom_call.1} parent=11 // pred_region
          %261 = vsyncadd [#allocation10], 0
          %s262 = sshll.u32 %s3, 4
          %s263 = int_to_ptr.hbm [resolvable:$true] %s262
          %s264 = sshll.u32 [#allocation9], 4
          %s265 = int_to_ptr.vmem [resolvable:$true] %s264
          %270 = dma.hbm_to_vmem [thread:$0]  %s263, 1536, %s265, [#allocation10], 128, 128, 8
        $region16: #{tpu_custom_call.1} parent=11 // pred_fallthru
          _
        // Predicated region
        $region17: #{tpu_custom_call.1} parent=11 // pred_check
          %p271 = pneg %p148
        $region18: #{tpu_custom_call.1} parent=11 // pred_check_branch
          %273 = sbr.rel (%p271) target = $region20
        $region19: #{tpu_custom_call.1} parent=11 // pred_region
          _
        $region20: #{tpu_custom_call.1} parent=11 // pred_fallthru
          _
        // Predicated region
        $region21: #{tpu_custom_call.1} parent=11 // pred_check
          %p274 = pneg %p169
        $region22: #{tpu_custom_call.1} parent=11 // pred_check_branch
          %276 = sbr.rel (%p274) target = $region24
        $region23: #{tpu_custom_call.1} parent=11 // pred_region
          %278 = vsyncadd [#allocation10], 0
          %s279 = sshll.u32 %s5, 4
          %s280 = int_to_ptr.hbm [resolvable:$true] %s279
          %s281 = sshll.u32 [#allocation11], 4
          %s282 = int_to_ptr.vmem [resolvable:$true] %s281
          %287 = dma.hbm_to_vmem [thread:$0]  %s280, 512, %s282, [#allocation10], 128, 128, 8
        $region24: #{tpu_custom_call.1} parent=11 // pred_fallthru
          _
        // Predicated region
        $region25: #{tpu_custom_call.1} parent=11 // pred_check
          %p288 = pneg %p190
        $region26: #{tpu_custom_call.1} parent=11 // pred_check_branch
          %290 = sbr.rel (%p288) target = $region28
        $region27: #{tpu_custom_call.1} parent=11 // pred_region
          _
        $region28: #{tpu_custom_call.1} parent=11 // pred_fallthru
          _
      $region12: #{tpu_custom_call.1} parent=5 // pred_fallthru
        _
      %p291 = scmp.lt.s32.totalorder %s28, 2
      // Predicated region
      $region29: #{tpu_custom_call.1} parent=5 // pred_check
        %p292 = pneg %p291
      $region30: #{tpu_custom_call.1} parent=5 // pred_check_branch
        %294 = sbr.rel (%p292) target = $region32
      $region31: #{tpu_custom_call.1} parent=5 // pred_region
        // Predicated region
        $region33: #{tpu_custom_call.1} parent=31 // pred_check
          %p295 = pneg %p48
        $region34: #{tpu_custom_call.1} parent=31 // pred_check_branch
          %297 = sbr.rel (%p295) target = $region36
        $region35: #{tpu_custom_call.1} parent=31 // pred_region
          %s298 = sand.u32 %s38, 1
          %s299 = scalar_lea.sflag [#allocation4], %s298
          %s300 = sand.u32 %s38, 1
          %s301 = smul.addr %s300, 8
          %s302 = scalar_lea.vmem [#allocation3], %s301
          %304 = vsyncadd %s299, 0
          %s305 = smul.addr %s28, 8
          %s306 = scalar_lea.hbm %s0, %s305
          %s308 = sshll.u32 %s306, 4
          %s309 = int_to_ptr.hbm [resolvable:$true] %s308
          %s310 = sshll.u32 %s302, 4
          %s311 = int_to_ptr.vmem [resolvable:$true] %s310
          %313 = dma.hbm_to_vmem [thread:$0]  %s309, 128, %s311, %s299
        $region36: #{tpu_custom_call.1} parent=31 // pred_fallthru
          _
        // Predicated region
        $region37: #{tpu_custom_call.1} parent=31 // pred_check
          %p314 = pneg %p74
        $region38: #{tpu_custom_call.1} parent=31 // pred_check_branch
          %316 = sbr.rel (%p314) target = $region40
        $region39: #{tpu_custom_call.1} parent=31 // pred_region
          %s317 = sand.u32 %s28, 1
          %s318 = scalar_lea.sflag [#allocation7], %s317
          %s319 = sand.u32 %s64, 1
          %s320 = smul.addr %s319, 8
          %s321 = scalar_lea.vmem [#allocation6], %s320
          %323 = vsyncadd %s318, 0
          %s324 = smul.addr %s28, 8
          %s325 = scalar_lea.hbm %s1, %s324
          %s327 = sshll.u32 %s325, 4
          %s328 = int_to_ptr.hbm [resolvable:$true] %s327
          %s329 = sshll.u32 %s321, 4
          %s330 = int_to_ptr.vmem [resolvable:$true] %s329
          %332 = dma.hbm_to_vmem [thread:$0]  %s328, 128, %s330, %s318
        $region40: #{tpu_custom_call.1} parent=31 // pred_fallthru
          _
        // Predicated region
        $region41: #{tpu_custom_call.1} parent=31 // pred_check
          %p333 = pneg %p100
        $region42: #{tpu_custom_call.1} parent=31 // pred_check_branch
          %335 = sbr.rel (%p333) target = $region44
        $region43: #{tpu_custom_call.1} parent=31 // pred_region
          %s336 = sand.u32 %s28, 1
          %s337 = scalar_lea.sflag [#allocation7], %s336
          %s338 = sand.u32 %s90, 1
          %s339 = smul.addr %s338, 8
          %s340 = scalar_lea.vmem [#allocation8], %s339
          %342 = vsyncadd %s337, 0
          %s343 = smul.addr %s28, 8
          %s344 = scalar_lea.hbm %s2, %s343
          %s346 = sshll.u32 %s344, 4
          %s347 = int_to_ptr.hbm [resolvable:$true] %s346
          %s348 = sshll.u32 %s340, 4
          %s349 = int_to_ptr.vmem [resolvable:$true] %s348
          %351 = dma.hbm_to_vmem [thread:$0]  %s347, 128, %s349, %s337
        $region44: #{tpu_custom_call.1} parent=31 // pred_fallthru
          _
      $region32: #{tpu_custom_call.1} parent=5 // pred_fallthru
        _
      %p352 = scmp.le.s32.totalorder 1, %s28
      %p353 = scmp.lt.s32.totalorder %s28, 3
      %p354 = pnand %p352, %p353
      %p355 = pneg %p354
      // Predicated region
      $region45: #{tpu_custom_call.1} parent=5 // pred_check
        _
      $region46: #{tpu_custom_call.1} parent=5 // pred_check_branch
        %357 = sbr.rel (%p354) target = $region48
      $region47: #{tpu_custom_call.1} parent=5 // pred_region
        %s358 = ssub.s32 %s28, 1
        %s359 = sand.u32 %s41, 1
        %s360 = scalar_lea.sflag [#allocation4], %s359
        %s361 = sand.u32 %s41, 1
        %s362 = smul.addr %s361, 8
        %s363 = scalar_lea.vmem [#allocation3], %s362
        // Predicated region
        $region49: #{tpu_custom_call.1} parent=47 // pred_check
          %p364 = pneg %p54
        $region50: #{tpu_custom_call.1} parent=47 // pred_check_branch
          %366 = sbr.rel (%p364) target = $region52
        $region51: #{tpu_custom_call.1} parent=47 // pred_region
          %368 = dma.done %s360, 128
        $region52: #{tpu_custom_call.1} parent=47 // pred_fallthru
          _
        %s369 = sand.u32 %s33, 1
        %s370 = scalar_lea.sflag [#allocation7], %s369
        %s371 = sand.u32 %s67, 1
        %s372 = smul.addr %s371, 8
        %s373 = scalar_lea.vmem [#allocation6], %s372
        // Predicated region
        $region53: #{tpu_custom_call.1} parent=47 // pred_check
          %p374 = pneg %p80
        $region54: #{tpu_custom_call.1} parent=47 // pred_check_branch
          %376 = sbr.rel (%p374) target = $region56
        $region55: #{tpu_custom_call.1} parent=47 // pred_region
          %378 = dma.done %s370, 128
        $region56: #{tpu_custom_call.1} parent=47 // pred_fallthru
          _
        %s379 = sand.u32 %s33, 1
        %s380 = scalar_lea.sflag [#allocation7], %s379
        %s381 = sand.u32 %s93, 1
        %s382 = smul.addr %s381, 8
        %s383 = scalar_lea.vmem [#allocation8], %s382
        // Predicated region
        $region57: #{tpu_custom_call.1} parent=47 // pred_check
          %p384 = pneg %p106
        $region58: #{tpu_custom_call.1} parent=47 // pred_check_branch
          %386 = sbr.rel (%p384) target = $region60
        $region59: #{tpu_custom_call.1} parent=47 // pred_region
          %388 = dma.done %s380, 128
        $region60: #{tpu_custom_call.1} parent=47 // pred_fallthru
          _
        // Predicated region
        $region61: #{tpu_custom_call.1} parent=47 // pred_check
          %p389 = pneg %p127
        $region62: #{tpu_custom_call.1} parent=47 // pred_check_branch
          %391 = sbr.rel (%p389) target = $region64
        $region63: #{tpu_custom_call.1} parent=47 // pred_region
          %393 = dma.done [#allocation10], 1536
        $region64: #{tpu_custom_call.1} parent=47 // pred_fallthru
          _
        // Predicated region
        $region65: #{tpu_custom_call.1} parent=47 // pred_check
          %p394 = pneg %p169
        $region66: #{tpu_custom_call.1} parent=47 // pred_check_branch
          %396 = sbr.rel (%p394) target = $region68
        $region67: #{tpu_custom_call.1} parent=47 // pred_region
          %398 = dma.done [#allocation10], 512
        $region68: #{tpu_custom_call.1} parent=47 // pred_fallthru
          _
        %s399 = sand.u32 %s41, 1
        %s400 = scalar_lea.sflag [#allocation4], %s399
        %s401 = sand.u32 %s41, 1
        %s402 = smul.addr %s401, 8
        %s403 = scalar_lea.vmem [#allocation3], %s402
        %p404 = pneg %p54
        %p405 = pneg %p51
        %s406 = sand.u32 %s33, 1
        %s407 = scalar_lea.sflag [#allocation7], %s406
        %s408 = sand.u32 %s67, 1
        %s409 = smul.addr %s408, 8
        %s410 = scalar_lea.vmem [#allocation6], %s409
        %p411 = pneg %p80
        %p412 = pneg %p77
        %s413 = sand.u32 %s33, 1
        %s414 = scalar_lea.sflag [#allocation7], %s413
        %s415 = sand.u32 %s93, 1
        %s416 = smul.addr %s415, 8
        %s417 = scalar_lea.vmem [#allocation8], %s416
        %p418 = pneg %p106
        %p419 = pneg %p103
        %p420 = pneg %p127
        %p421 = pneg %p124
        %p422 = pneg %p148
        %p423 = pneg %p145
        %p424 = pneg %p169
        %p425 = pneg %p166
        %p426 = pneg %p190
        %p427 = pneg %p187
        %p428 = pneg %p216
        %p429 = pneg %p213
        %s430 = sand.u32 %s203, 1
        %s431 = scalar_lea.sflag [#allocation5], %s430
        %s432 = sand.u32 %s203, 1
        %s433 = smul.addr %s432, 32
        %s434 = scalar_lea.vmem [#allocation12], %s433
        %p435 = pneg %p242
        %p436 = pneg %p239
        %s437 = sand.u32 %s229, 1
        %s438 = scalar_lea.sflag [#allocation14], %s437
        %s439 = sand.u32 %s229, 1
        %s440 = smul.addr %s439, 8
        %s441 = scalar_lea.vmem [#allocation13], %s440
        %v442 = vld [vmem:[%s363] sm:$0xff]
        %v443 = vld [vmem:[%s373] sm:$0xff]
        %v444 = vld [vmem:[%s383] sm:$0xff]
        %v445 = vld [vmem:[#allocation9] sm:$0xff]
        %v446 = vld [vmem:[#allocation9 + $0x8] sm:$0xff]
        %v447 = vld [vmem:[#allocation9 + $0x10] sm:$0xff]
        %v448 = vld [vmem:[#allocation9 + $0x18] sm:$0xff]
        %v449 = vld [vmem:[%s4] sm:$0x1]
        %v451 = vperm.slane %v449, 0
        %vm453 = vcmask 261120
        %v455 = vsel %vm453, %v442, 0
        %457 = vmatpush.msra.mxu0 0.0
        %458 = vmatpush.msra.mxu0 0.0
        %459 = vmatpush.msra.mxu0 0.0
        %460 = vmatpush.msra.mxu0 0.0
        %461 = vmatpush.msra.mxu0 0.0
        %462 = vmatpush.msra.mxu0 0.0
        %463 = vmatpush.msra.mxu0 0.0
        %464 = vmatpush.msra.mxu0 0.0
        %465 = vmatpush.msra.mxu0 0.0
        %466 = vmatpush.msra.mxu0 0.0
        %467 = vmatpush.msra.mxu0 0.0
        %468 = vmatpush.msra.mxu0 0.0
        %469 = vmatpush.msra.mxu0 %v448
        %470 = vmatpush.msra.mxu0 %v447
        %471 = vmatpush.msra.mxu0 %v446
        %472 = vmatpush.msra.mxu0 %v445
        %473 = vmatmul.f32.gmra.mxu0 %v455
        %v474 = vpop.f32.mrf.mxu0
        %v475 = vadd.f32 %v451, %v474
        %476 = vdwg.mxu0
        %s477 = scalar_lea.vmem [#allocation9], 32
        %v478 = vld [vmem:[%s477] sm:$0xff]
        %v479 = vld [vmem:[%s477 + $0x8] sm:$0xff]
        %v480 = vld [vmem:[%s477 + $0x10] sm:$0xff]
        %v481 = vld [vmem:[%s477 + $0x18] sm:$0xff]
        %s482 = scalar_lea.vmem %s4, 1
        %v483 = vld [vmem:[%s482] sm:$0x1]
        %v485 = vperm.slane %v483, 0
        %v488 = vsel %vm453, %v443, 0
        %490 = vmatpush.msra.mxu0 0.0
        %491 = vmatpush.msra.mxu0 0.0
        %492 = vmatpush.msra.mxu0 0.0
        %493 = vmatpush.msra.mxu0 0.0
        %494 = vmatpush.msra.mxu0 0.0
        %495 = vmatpush.msra.mxu0 0.0
        %496 = vmatpush.msra.mxu0 0.0
        %497 = vmatpush.msra.mxu0 0.0
        %498 = vmatpush.msra.mxu0 0.0
        %499 = vmatpush.msra.mxu0 0.0
        %500 = vmatpush.msra.mxu0 0.0
        %501 = vmatpush.msra.mxu0 0.0
        %502 = vmatpush.msra.mxu0 %v481
        %503 = vmatpush.msra.mxu0 %v480
        %504 = vmatpush.msra.mxu0 %v479
        %505 = vmatpush.msra.mxu0 %v478
        %506 = vmatmul.f32.gmra.mxu0 %v488
        %v507 = vpop.f32.mrf.mxu0
        %v508 = vadd.f32 %v485, %v507
        %509 = vdwg.mxu0
        %s510 = scalar_lea.vmem [#allocation9], 64
        %v511 = vld [vmem:[%s510] sm:$0xff]
        %v512 = vld [vmem:[%s510 + $0x8] sm:$0xff]
        %v513 = vld [vmem:[%s510 + $0x10] sm:$0xff]
        %v514 = vld [vmem:[%s510 + $0x18] sm:$0xff]
        %s515 = scalar_lea.vmem %s4, 2
        %v516 = vld [vmem:[%s515] sm:$0x1]
        %v518 = vperm.slane %v516, 0
        %v521 = vsel %vm453, %v444, 0
        %523 = vmatpush.msra.mxu0 0.0
        %524 = vmatpush.msra.mxu0 0.0
        %525 = vmatpush.msra.mxu0 0.0
        %526 = vmatpush.msra.mxu0 0.0
        %527 = vmatpush.msra.mxu0 0.0
        %528 = vmatpush.msra.mxu0 0.0
        %529 = vmatpush.msra.mxu0 0.0
        %530 = vmatpush.msra.mxu0 0.0
        %531 = vmatpush.msra.mxu0 0.0
        %532 = vmatpush.msra.mxu0 0.0
        %533 = vmatpush.msra.mxu0 0.0
        %534 = vmatpush.msra.mxu0 0.0
        %535 = vmatpush.msra.mxu0 %v514
        %536 = vmatpush.msra.mxu0 %v513
        %537 = vmatpush.msra.mxu0 %v512
        %538 = vmatpush.msra.mxu0 %v511
        %539 = vmatmul.f32.gmra.mxu0 %v521
        %v540 = vpop.f32.mrf.mxu0
        %v541 = vadd.f32 %v518, %v540
        %542 = vdwg.mxu0
        %544 = vrot.lane.b32.xlu0 %v475, 120
        %v545 = vpop.permute.xlu0 %544
        %546 = vrot.lane.b32.xlu0 %v475, 112
        %v547 = vpop.permute.xlu0 %546
        %548 = vrot.lane.b32.xlu0 %v475, 104
        %v549 = vpop.permute.xlu0 %548
        %551 = vrot.lane.b32.xlu0 %v508, 120
        %v552 = vpop.permute.xlu0 %551
        %553 = vrot.lane.b32.xlu0 %v508, 112
        %v554 = vpop.permute.xlu0 %553
        %555 = vrot.lane.b32.xlu0 %v508, 104
        %v556 = vpop.permute.xlu0 %555
        %558 = vrot.lane.b32.xlu0 %v541, 120
        %v559 = vpop.permute.xlu0 %558
        %561 = vrot.lane.b32.xlu0 %v541, 112
        %v562 = vpop.permute.xlu0 %561
        %564 = vrot.lane.b32.xlu0 %v541, 104
        %v565 = vpop.permute.xlu0 %564
        %vm567 = vcmask 64512
        %v568 = vsel %vm567, %v475, 0
        %v570 = vsel %vm567, %v508, 0
        %572 = vmatpush.xpose.msra.mxu0 0.0
        %573 = vmatpush.xpose.msra.mxu0 0.0
        %574 = vmatpush.xpose.msra.mxu0 0.0
        %575 = vmatpush.xpose.msra.mxu0 0.0
        %576 = vmatpush.xpose.msra.mxu0 0.0
        %577 = vmatpush.xpose.msra.mxu0 0.0
        %578 = vmatpush.xpose.msra.mxu0 0.0
        %579 = vmatpush.xpose.msra.mxu0 0.0
        %580 = vmatpush.xpose.msra.mxu0 0.0
        %581 = vmatpush.xpose.msra.mxu0 0.0
        %582 = vmatpush.xpose.msra.mxu0 0.0
        %583 = vmatpush.xpose.msra.mxu0 0.0
        %584 = vmatpush.xpose.msra.mxu0 0.0
        %585 = vmatpush.xpose.msra.mxu0 0.0
        %586 = vmatpush.xpose.msra.mxu0 0.0
        %587 = vmatpush.xpose.msra.mxu0 %v570
        %588 = vmatmul.f32.gmra.mxu0 %v568
        %v589 = vpop.f32.mrf.mxu0
        %v590 = vadd.f32 0.0, %v589
        %591 = vdwg.mxu0
        %v592 = vsel %vm567, %v545, 0
        %v594 = vsel %vm567, %v552, 0
        %596 = vmatpush.xpose.msra.mxu0 0.0
        %597 = vmatpush.xpose.msra.mxu0 0.0
        %598 = vmatpush.xpose.msra.mxu0 0.0
        %599 = vmatpush.xpose.msra.mxu0 0.0
        %600 = vmatpush.xpose.msra.mxu0 0.0
        %601 = vmatpush.xpose.msra.mxu0 0.0
        %602 = vmatpush.xpose.msra.mxu0 0.0
        %603 = vmatpush.xpose.msra.mxu0 0.0
        %604 = vmatpush.xpose.msra.mxu0 0.0
        %605 = vmatpush.xpose.msra.mxu0 0.0
        %606 = vmatpush.xpose.msra.mxu0 0.0
        %607 = vmatpush.xpose.msra.mxu0 0.0
        %608 = vmatpush.xpose.msra.mxu0 0.0
        %609 = vmatpush.xpose.msra.mxu0 0.0
        %610 = vmatpush.xpose.msra.mxu0 0.0
        %611 = vmatpush.xpose.msra.mxu0 %v594
        %612 = vmatmul.f32.gmra.mxu0 %v592
        %v613 = vpop.f32.mrf.mxu0
        %v614 = vadd.f32 0.0, %v613
        %615 = vdwg.mxu0
        %v616 = vsel %vm567, %v547, 0
        %v618 = vsel %vm567, %v554, 0
        %620 = vmatpush.xpose.msra.mxu0 0.0
        %621 = vmatpush.xpose.msra.mxu0 0.0
        %622 = vmatpush.xpose.msra.mxu0 0.0
        %623 = vmatpush.xpose.msra.mxu0 0.0
        %624 = vmatpush.xpose.msra.mxu0 0.0
        %625 = vmatpush.xpose.msra.mxu0 0.0
        %626 = vmatpush.xpose.msra.mxu0 0.0
        %627 = vmatpush.xpose.msra.mxu0 0.0
        %628 = vmatpush.xpose.msra.mxu0 0.0
        %629 = vmatpush.xpose.msra.mxu0 0.0
        %630 = vmatpush.xpose.msra.mxu0 0.0
        %631 = vmatpush.xpose.msra.mxu0 0.0
        %632 = vmatpush.xpose.msra.mxu0 0.0
        %633 = vmatpush.xpose.msra.mxu0 0.0
        %634 = vmatpush.xpose.msra.mxu0 0.0
        %635 = vmatpush.xpose.msra.mxu0 %v618
        %636 = vmatmul.f32.gmra.mxu0 %v616
        %v637 = vpop.f32.mrf.mxu0
        %v638 = vadd.f32 0.0, %v637
        %639 = vdwg.mxu0
        %v640 = vsel %vm567, %v549, 0
        %v642 = vsel %vm567, %v556, 0
        %644 = vmatpush.xpose.msra.mxu0 0.0
        %645 = vmatpush.xpose.msra.mxu0 0.0
        %646 = vmatpush.xpose.msra.mxu0 0.0
        %647 = vmatpush.xpose.msra.mxu0 0.0
        %648 = vmatpush.xpose.msra.mxu0 0.0
        %649 = vmatpush.xpose.msra.mxu0 0.0
        %650 = vmatpush.xpose.msra.mxu0 0.0
        %651 = vmatpush.xpose.msra.mxu0 0.0
        %652 = vmatpush.xpose.msra.mxu0 0.0
        %653 = vmatpush.xpose.msra.mxu0 0.0
        %654 = vmatpush.xpose.msra.mxu0 0.0
        %655 = vmatpush.xpose.msra.mxu0 0.0
        %656 = vmatpush.xpose.msra.mxu0 0.0
        %657 = vmatpush.xpose.msra.mxu0 0.0
        %658 = vmatpush.xpose.msra.mxu0 0.0
        %659 = vmatpush.xpose.msra.mxu0 %v642
        %660 = vmatmul.f32.gmra.mxu0 %v640
        %v661 = vpop.f32.mrf.mxu0
        %v662 = vadd.f32 0.0, %v661
        %663 = vdwg.mxu0
        %v664 = vmul.f32 %v590, 0.17677669
        %v665 = vmul.f32 %v614, 0.17677669
        %v666 = vmul.f32 %v638, 0.17677669
        %v667 = vmul.f32 %v662, 0.17677669
        %668 = vst.msk [vmem:[%s434] sm:$0xff] %vm567, %v664
        %669 = vst.msk [vmem:[%s434 + $0x8] sm:$0xff] %vm567, %v665
        %670 = vst.msk [vmem:[%s434 + $0x10] sm:$0xff] %vm567, %v666
        %671 = vst.msk [vmem:[%s434 + $0x18] sm:$0xff] %vm567, %v667
        %v673 = vsel %vm567, %v664, 0
        %675 = vmatpush.msra.mxu0 0.0
        %676 = vmatpush.msra.mxu0 0.0
        %677 = vmatpush.msra.mxu0 0.0
        %678 = vmatpush.msra.mxu0 0.0
        %679 = vmatpush.msra.mxu0 0.0
        %680 = vmatpush.msra.mxu0 0.0
        %681 = vmatpush.msra.mxu0 0.0
        %682 = vmatpush.msra.mxu0 0.0
        %683 = vmatpush.msra.mxu0 0.0
        %684 = vmatpush.msra.mxu0 0.0
        %685 = vmatpush.msra.mxu0 0.0
        %686 = vmatpush.msra.mxu0 0.0
        %687 = vmatpush.msra.mxu0 0.0
        %688 = vmatpush.msra.mxu0 0.0
        %689 = vmatpush.msra.mxu0 0.0
        %690 = vmatpush.msra.mxu0 %v541
        %691 = vmatmul.f32.gmra.mxu0 %v673
        %v692 = vpop.f32.mrf.mxu0
        %v693 = vadd.f32 0.0, %v692
        %694 = vdwg.mxu0
        %v696 = vsel %vm567, %v665, 0
        %698 = vmatpush.msra.mxu0 0.0
        %699 = vmatpush.msra.mxu0 0.0
        %700 = vmatpush.msra.mxu0 0.0
        %701 = vmatpush.msra.mxu0 0.0
        %702 = vmatpush.msra.mxu0 0.0
        %703 = vmatpush.msra.mxu0 0.0
        %704 = vmatpush.msra.mxu0 0.0
        %705 = vmatpush.msra.mxu0 0.0
        %706 = vmatpush.msra.mxu0 0.0
        %707 = vmatpush.msra.mxu0 0.0
        %708 = vmatpush.msra.mxu0 0.0
        %709 = vmatpush.msra.mxu0 0.0
        %710 = vmatpush.msra.mxu0 0.0
        %711 = vmatpush.msra.mxu0 0.0
        %712 = vmatpush.msra.mxu0 0.0
        %713 = vmatpush.msra.mxu0 %v559
        %714 = vmatmul.f32.gmra.mxu0 %v696
        %v715 = vpop.f32.mrf.mxu0
        %v716 = vadd.f32 0.0, %v715
        %717 = vdwg.mxu0
        %v719 = vsel %vm567, %v666, 0
        %721 = vmatpush.msra.mxu0 0.0
        %722 = vmatpush.msra.mxu0 0.0
        %723 = vmatpush.msra.mxu0 0.0
        %724 = vmatpush.msra.mxu0 0.0
        %725 = vmatpush.msra.mxu0 0.0
        %726 = vmatpush.msra.mxu0 0.0
        %727 = vmatpush.msra.mxu0 0.0
        %728 = vmatpush.msra.mxu0 0.0
        %729 = vmatpush.msra.mxu0 0.0
        %730 = vmatpush.msra.mxu0 0.0
        %731 = vmatpush.msra.mxu0 0.0
        %732 = vmatpush.msra.mxu0 0.0
        %733 = vmatpush.msra.mxu0 0.0
        %734 = vmatpush.msra.mxu0 0.0
        %735 = vmatpush.msra.mxu0 0.0
        %736 = vmatpush.msra.mxu0 %v562
        %737 = vmatmul.f32.gmra.mxu0 %v719
        %v738 = vpop.f32.mrf.mxu0
        %v739 = vadd.f32 0.0, %v738
        %740 = vdwg.mxu0
        %v742 = vsel %vm567, %v667, 0
        %744 = vmatpush.msra.mxu0 0.0
        %745 = vmatpush.msra.mxu0 0.0
        %746 = vmatpush.msra.mxu0 0.0
        %747 = vmatpush.msra.mxu0 0.0
        %748 = vmatpush.msra.mxu0 0.0
        %749 = vmatpush.msra.mxu0 0.0
        %750 = vmatpush.msra.mxu0 0.0
        %751 = vmatpush.msra.mxu0 0.0
        %752 = vmatpush.msra.mxu0 0.0
        %753 = vmatpush.msra.mxu0 0.0
        %754 = vmatpush.msra.mxu0 0.0
        %755 = vmatpush.msra.mxu0 0.0
        %756 = vmatpush.msra.mxu0 0.0
        %757 = vmatpush.msra.mxu0 0.0
        %758 = vmatpush.msra.mxu0 0.0
        %759 = vmatpush.msra.mxu0 %v565
        %760 = vmatmul.f32.gmra.mxu0 %v742
        %v761 = vpop.f32.mrf.mxu0
        %v762 = vadd.f32 0.0, %v761
        %763 = vdwg.mxu0
        %764 = vst.msk [vmem:[#allocation2] sm:$0xff] %vm567, %v693
        %765 = vst.msk [vmem:[#allocation2 + $0x8] sm:$0xff] %vm567, %v716
        %766 = vst.msk [vmem:[#allocation2 + $0x10] sm:$0xff] %vm567, %v739
        %767 = vst.msk [vmem:[#allocation2 + $0x18] sm:$0xff] %vm567, %v762
        %v768 = vld [vmem:[#allocation2] ss:$4 sm:$0xff]
        %s769 = scalar_lea.vmem [#allocation2], 1
        %v770 = vld [vmem:[%s769] ss:$4 sm:$0xff]
        %s771 = scalar_lea.vmem [#allocation2], 2
        %v772 = vld [vmem:[%s771] ss:$4 sm:$0xff]
        %s773 = scalar_lea.vmem [#allocation2], 3
        %v774 = vld [vmem:[%s773] ss:$4 sm:$0xff]
        %776 = vrot.lane.b32.xlu0 %v770, 8
        %v777 = vpop.permute.xlu0 %776
        %780 = vrot.lane.b32.xlu0 %v772, 16
        %v781 = vpop.permute.xlu0 %780
        %784 = vrot.lane.b32.xlu0 %v774, 24
        %v785 = vpop.permute.xlu0 %784
        %v787 = vsel %vm567, %v768, %v777
        %vm788 = vcmask 130048
        %v789 = vsel %vm788, %v787, %v781
        %vm790 = vcmask 195584
        %v791 = vsel %vm790, %v789, %v785
        %v792 = vld [vmem:[#allocation11] sm:$0xff]
        %v793 = vld [vmem:[#allocation11 + $0x8] sm:$0xff]
        %v794 = vld [vmem:[#allocation11 + $0x10] sm:$0xff]
        %v795 = vld [vmem:[#allocation11 + $0x18] sm:$0xff]
        %v796 = vld [vmem:[%s6] sm:$0x1]
        %v798 = vperm.slane %v796, 0
        %v801 = vsel %vm453, %v791, 0
        %803 = vmatpush.msra.mxu0 0.0
        %804 = vmatpush.msra.mxu0 0.0
        %805 = vmatpush.msra.mxu0 0.0
        %806 = vmatpush.msra.mxu0 0.0
        %807 = vmatpush.msra.mxu0 0.0
        %808 = vmatpush.msra.mxu0 0.0
        %809 = vmatpush.msra.mxu0 0.0
        %810 = vmatpush.msra.mxu0 0.0
        %811 = vmatpush.msra.mxu0 0.0
        %812 = vmatpush.msra.mxu0 0.0
        %813 = vmatpush.msra.mxu0 0.0
        %814 = vmatpush.msra.mxu0 0.0
        %815 = vmatpush.msra.mxu0 %v795
        %816 = vmatpush.msra.mxu0 %v794
        %817 = vmatpush.msra.mxu0 %v793
        %818 = vmatpush.msra.mxu0 %v792
        %819 = vmatmul.f32.gmra.mxu0 %v801
        %v820 = vpop.f32.mrf.mxu0
        %v821 = vadd.f32 %v798, %v820
        %822 = vdwg.mxu0
        %823 = vst.msk [vmem:[%s441] sm:$0xff] %vm453, %v821
        %s824 = sand.u32 %s203, 1
        %s825 = scalar_lea.sflag [#allocation5], %s824
        %s826 = sand.u32 %s203, 1
        %s827 = smul.addr %s826, 32
        %s828 = scalar_lea.vmem [#allocation12], %s827
        %s829 = sand.u32 %s229, 1
        %s830 = scalar_lea.sflag [#allocation14], %s829
        %s831 = sand.u32 %s229, 1
        %s832 = smul.addr %s831, 8
        %s833 = scalar_lea.vmem [#allocation13], %s832
        // Predicated region
        $region69: #{tpu_custom_call.1} parent=47 // pred_check
          %p834 = pneg %p213
        $region70: #{tpu_custom_call.1} parent=47 // pred_check_branch
          %836 = sbr.rel (%p834) target = $region72
        $region71: #{tpu_custom_call.1} parent=47 // pred_region
          %838 = vsyncadd %s825, 0
          %s839 = smul.addr %s33, 4
          %s840 = smul.addr %s839, 8
          %s841 = scalar_lea.hbm %s7, %s840
          %s842 = sshll.u32 %s828, 4
          %s843 = int_to_ptr.vmem [resolvable:$true] %s842
          %s844 = sshll.u32 %s841, 4
          %s845 = int_to_ptr.hbm [resolvable:$true] %s844
          %850 = dma.vmem_to_hbm [thread:$0]  %s843, 512, %s845, %s825, 128, 128, 8
        $region72: #{tpu_custom_call.1} parent=47 // pred_fallthru
          _
        // Predicated region
        $region73: #{tpu_custom_call.1} parent=47 // pred_check
          %p851 = pneg %p239
        $region74: #{tpu_custom_call.1} parent=47 // pred_check_branch
          %853 = sbr.rel (%p851) target = $region76
        $region75: #{tpu_custom_call.1} parent=47 // pred_region
          %855 = vsyncadd %s830, 0
          %s856 = smul.addr %s33, 8
          %s857 = scalar_lea.hbm %s8, %s856
          %s859 = sshll.u32 %s833, 4
          %s860 = int_to_ptr.vmem [resolvable:$true] %s859
          %s861 = sshll.u32 %s857, 4
          %s862 = int_to_ptr.hbm [resolvable:$true] %s861
          %864 = dma.vmem_to_hbm [thread:$0]  %s860, 128, %s862, %s830
        $region76: #{tpu_custom_call.1} parent=47 // pred_fallthru
          _
      $region48: #{tpu_custom_call.1} parent=5 // pred_fallthru
        _
      %p865 = scmp.le.s32.totalorder 2, %s28
      // Predicated region
      $region77: #{tpu_custom_call.1} parent=5 // pred_check
        %p866 = pneg %p865
      $region78: #{tpu_custom_call.1} parent=5 // pred_check_branch
        %868 = sbr.rel (%p866) target = $region80
      $region79: #{tpu_custom_call.1} parent=5 // pred_region
        %s869 = ssub.s32 %s28, 2
        // Predicated region
        $region81: #{tpu_custom_call.1} parent=79 // pred_check
          %p870 = pneg %p219
        $region82: #{tpu_custom_call.1} parent=79 // pred_check_branch
          %872 = sbr.rel (%p870) target = $region84
        $region83: #{tpu_custom_call.1} parent=79 // pred_region
          %s873 = sand.u32 %s204, 1
          %s874 = scalar_lea.sflag [#allocation5], %s873
          %s875 = sand.u32 %s204, 1
          %s876 = smul.addr %s875, 32
          %s877 = scalar_lea.vmem [#allocation12], %s876
          %879 = dma.done %s874, 512
        $region84: #{tpu_custom_call.1} parent=79 // pred_fallthru
          _
        // Predicated region
        $region85: #{tpu_custom_call.1} parent=79 // pred_check
          %p880 = pneg %p245
        $region86: #{tpu_custom_call.1} parent=79 // pred_check_branch
          %882 = sbr.rel (%p880) target = $region88
        $region87: #{tpu_custom_call.1} parent=79 // pred_region
          %s883 = sand.u32 %s230, 1
          %s884 = scalar_lea.sflag [#allocation14], %s883
          %s885 = sand.u32 %s230, 1
          %s886 = smul.addr %s885, 8
          %s887 = scalar_lea.vmem [#allocation13], %s886
          %889 = dma.done %s884, 128
        $region88: #{tpu_custom_call.1} parent=79 // pred_fallthru
          _
      $region80: #{tpu_custom_call.1} parent=5 // pred_fallthru
        _
    $region6: #{tpu_custom_call.1} parent=1 // loop_footer
      %s32 = sadd.s32 1, %s28
    $region7: #{tpu_custom_call.1} parent=1 // loop_footer_branch
      %27 = sbr.rel target = $region3
    $region8: #{tpu_custom_call.1} parent=1 // loop_exit
      _
    %890 = vsyncpa [#allocation4], 1
    %s891 = scalar_lea.sflag [#allocation4], 1
    %892 = vsyncpa %s891, 1
    %893 = vsyncpa [#allocation7], 1
    %s894 = scalar_lea.sflag [#allocation7], 1
    %895 = vsyncpa %s894, 1
    %896 = vsyncpa [#allocation10], 1
    %897 = vsyncpa [#allocation5], 1
    %s898 = scalar_lea.sflag [#allocation5], 1
    %899 = vsyncpa %s898, 1
    %900 = vsyncpa [#allocation14], 1
    %s901 = scalar_lea.sflag [#allocation14], 1
    %902 = vsyncpa %s901, 1

</llo_original>
